<compile_context>
chip_gen: v7x
topology: tpu7x:2x2x1
jax: 0.10.0
libtpu: 0.0.40
codegen_flags: <defaults>
</compile_context>

<pallas_src>
import functools

import jax
import jax.numpy as jnp
from jax.experimental import pallas as pl
from jax.experimental.pallas import tpu as pltpu


def _round_up(n, m):
    return ((n + m - 1) // m) * m


def _pgn_kernel(x_ref, w1_ref, w23_ref, b_ref, out_ref):
    """Fused MLP forward: two hidden layers + fused (policy|value) head.

    x_ref   : (B_pad, S)            bf16
    w1_ref  : (S, H1p)              bf16
    w23_ref : (H1p + H2p, H2p)      bf16   rows [0:H1p) = layer2 W, [H1p:H1p+H2p) = fused head W
    b_ref   : (1, H1p + 2*H2p)      f32    [b1 | b2 | b_head], 128-aligned segments
    out_ref : (B_pad, H2p)          f32
    """
    H1 = w1_ref.shape[1]
    H2 = out_ref.shape[1]

    b1 = b_ref[:, 0:H1]
    b2 = b_ref[:, H1:H1 + H2]
    bh = b_ref[:, H1 + H2:H1 + 2 * H2]

    # Layer 1: Linear + ReLU (Dropout == identity in eval mode). bf16 MXU, f32 acc.
    h1 = jnp.dot(x_ref[...], w1_ref[...], preferred_element_type=jnp.float32) + b1
    h1 = jnp.maximum(h1, 0.0).astype(jnp.bfloat16)

    # Layer 2: Linear + ReLU.
    h2 = jnp.dot(h1, w23_ref[0:H1, :], preferred_element_type=jnp.float32) + b2
    h2 = jnp.maximum(h2, 0.0).astype(jnp.bfloat16)

    # Fused heads: one lane-dense 128-wide matmul + one unmasked store.
    out_ref[...] = (
        jnp.dot(h2, w23_ref[H1:H1 + H2, :], preferred_element_type=jnp.float32) + bh
    )


def prepare_inference_params(params, action_dim):
    """Pack weights ONCE per weight update (hoisted out of the per-call path).

    Returns packed bf16 weights + a single f32 bias operand for the kernel.
    """
    w1, b1 = params["w1"], params["b1"]
    w2, b2 = params["w2"], params["b2"]
    wp, bp = params["wp"], params["bp"]
    wv, bv = params["wv"], params["bv"]

    S, H1 = w1.shape
    H2 = w2.shape[1]
    H1p = _round_up(H1, 128)
    H2p = max(_round_up(H2, 128), _round_up(action_dim + 1, 128))

    w1p = jnp.zeros((S, H1p), jnp.float32).at[:, :H1].set(w1)
    w2p = jnp.zeros((H1p, H2p), jnp.float32).at[:H1, :H2].set(w2)
    whp = jnp.zeros((H2p, H2p), jnp.float32)
    whp = whp.at[:H2, :action_dim].set(wp)
    whp = whp.at[:H2, action_dim:action_dim + 1].set(wv)
    # Layer-2 weight and fused head share N = H2p -> concat along K: one operand.
    w23 = jnp.concatenate([w2p, whp], axis=0)

    b = jnp.zeros((1, H1p + 2 * H2p), jnp.float32)
    b = b.at[:, :H1].set(b1)
    b = b.at[:, H1p:H1p + H2].set(b2)
    b = b.at[:, H1p + H2p:H1p + H2p + action_dim].set(bp)
    b = b.at[:, H1p + H2p + action_dim:H1p + H2p + action_dim + 1].set(bv)

    return {
        "w1": w1p.astype(jnp.bfloat16),
        "w23": w23.astype(jnp.bfloat16),
        "b": b,  # biases stay f32 (bias-add/ReLU are f32 in-kernel; v5e-safe)
    }


@functools.partial(jax.jit, static_argnums=(2,))
def policy_gradient_forward(state, prepared, action_dim):
    """Jitted: pad -> fused Pallas kernel -> slice.

    state    : (B, state_dim) f32
    prepared : output of prepare_inference_params
    returns (policy_logits (B, action_dim), value (B, 1))
    """
    B, _ = state.shape
    head_n = prepared["w23"].shape[1]

    # Pad batch to f32 sublane granularity (multiple of 8); cast activations to bf16.
    B_pad = max(8, _round_up(B, 8))
    x = state.astype(jnp.bfloat16)
    if B_pad != B:
        x = jnp.pad(x, ((0, B_pad - B), (0, 0)))

    vmem_spec = functools.partial(
        pl.BlockSpec, memory_space=pltpu.MemorySpace.VMEM)

    # Full, un-pipelined VMEM blocks: no grid -> no pipeline machinery and no
    # double-buffered weight copies for this overhead-bound kernel.
    fused = pl.pallas_call(
        _pgn_kernel,
        out_shape=jax.ShapeDtypeStruct((B_pad, head_n), jnp.float32),
        in_specs=[vmem_spec() for _ in range(4)],
        out_specs=vmem_spec(),
    )(x, prepared["w1"], prepared["w23"], prepared["b"])

    policy_logits = fused[:B, :action_dim]
    value = fused[:B, action_dim:action_dim + 1]
    return policy_logits, value


def init_params(key, state_dim, action_dim, hidden_dims=(256, 128)):
    """Deterministic synthetic initialization (uniform, PyTorch-like fan-in bound)."""
    params = {}
    dims = [state_dim] + list(hidden_dims)
    keys = jax.random.split(key, 2 * (len(hidden_dims) + 2))
    k_iter = iter(keys)

    def linear(in_dim, out_dim):
        bound = 1.0 / jnp.sqrt(in_dim)
        w = jax.random.uniform(next(k_iter), (in_dim, out_dim),
                               minval=-bound, maxval=bound, dtype=jnp.float32)
        b = jax.random.uniform(next(k_iter), (1, out_dim),
                               minval=-bound, maxval=bound, dtype=jnp.float32)
        return w, b

    params["w1"], params["b1"] = linear(dims[0], dims[1])
    params["w2"], params["b2"] = linear(dims[1], dims[2])
    params["wp"], params["bp"] = linear(dims[2], action_dim)
    params["wv"], params["bv"] = linear(dims[2], 1)
    return params


def reference_forward(state, params):
    """Pure-JAX reference mirroring the kernel's bf16 weight/activation rounding
    (f32 accumulation), for a tight correctness check."""
    def bf(a):
        return a.astype(jnp.bfloat16).astype(jnp.float32)

    x = bf(state)
    h1 = jnp.maximum(x @ bf(params["w1"]) + params["b1"], 0.0)
    h1 = bf(h1)
    h2 = jnp.maximum(h1 @ bf(params["w2"]) + params["b2"], 0.0)
    h2 = bf(h2)
    policy = h2 @ bf(params["wp"]) + params["bp"]
    value = h2 @ bf(params["wv"]) + params["bv"]
    return policy, value


if __name__ == "__main__":
    key = jax.random.PRNGKey(0)
    k_param, k_state = jax.random.split(key)

    batch = 2          # NOTE: for real rollouts, batch many env states (128-256) per call
    state_dim = 16
    action_dim = 8
    hidden_dims = (256, 128)

    params = init_params(k_param, state_dim, action_dim, hidden_dims)
    # Hoisted packing: done once per weight update, NOT per forward call.
    prepared = prepare_inference_params(params, action_dim)

    state = jax.random.normal(k_state, (batch, state_dim), dtype=jnp.float32)

    policy_logits, value = policy_gradient_forward(state, prepared, action_dim)
    jax.block_until_ready((policy_logits, value))

    # sanity check against pure-JAX reference (same bf16 weight rounding)
    ref_policy, ref_value = reference_forward(state, params)
    assert policy_logits.shape == (batch, action_dim)
    assert value.shape == (batch, 1)
    assert jnp.allclose(policy_logits, ref_policy, atol=1e-3, rtol=1e-3)
    assert jnp.allclose(value, ref_value, atol=1e-3, rtol=1e-3)

    print("KERNEL_OK")
</pallas_src>

<mosaic_0001>
module attributes {stable_mosaic.version = 11 : i64} {
  func.func @_pgn_kernel(%arg0: memref<8x16xbf16, #tpu.memory_space<vmem>>, %arg1: memref<16x256xbf16, #tpu.memory_space<vmem>>, %arg2: memref<384x128xbf16, #tpu.memory_space<vmem>>, %arg3: memref<1x512xf32, #tpu.memory_space<vmem>>, %arg4: memref<8x128xf32, #tpu.memory_space<vmem>>) attributes {dimension_semantics = [], scalar_prefetch = 0 : i64, scratch_operands = 0 : i64, tpu.core_type = #tpu.core_type<tc>} {
    %c0 = arith.constant 0 : index
    %c0_0 = arith.constant 0 : index
    %0 = vector.load %arg3[%c0, %c0_0] : memref<1x512xf32, #tpu.memory_space<vmem>>, vector<1x256xf32>
    %c0_1 = arith.constant 0 : index
    %c256 = arith.constant 256 : index
    %1 = vector.load %arg3[%c0_1, %c256] : memref<1x512xf32, #tpu.memory_space<vmem>>, vector<1x128xf32>
    %c0_2 = arith.constant 0 : index
    %c384 = arith.constant 384 : index
    %2 = vector.load %arg3[%c0_2, %c384] : memref<1x512xf32, #tpu.memory_space<vmem>>, vector<1x128xf32>
    %c0_3 = arith.constant 0 : index
    %c0_4 = arith.constant 0 : index
    %3 = vector.load %arg0[%c0_3, %c0_4] : memref<8x16xbf16, #tpu.memory_space<vmem>>, vector<8x16xbf16>
    %c0_5 = arith.constant 0 : index
    %c0_6 = arith.constant 0 : index
    %4 = vector.load %arg1[%c0_5, %c0_6] : memref<16x256xbf16, #tpu.memory_space<vmem>>, vector<16x256xbf16>
    %cst = arith.constant dense<0.000000e+00> : vector<8x256xf32>
    %5 = tpu.matmul %3, %4, %cst {dimension_numbers = #tpu.dot_dimension_numbers<[1], [0], [0], [1], [0, 0, 1, 1], [], []>} : vector<8x16xbf16>, vector<16x256xbf16>, vector<8x256xf32> -> vector<8x256xf32>
    %6 = vector.broadcast %0 : vector<1x256xf32> to vector<8x256xf32>
    %7 = arith.addf %5, %6 : vector<8x256xf32>
    %cst_7 = arith.constant 0.000000e+00 : f32
    %8 = vector.broadcast %cst_7 : f32 to vector<8x256xf32>
    %9 = arith.maximumf %7, %8 : vector<8x256xf32>
    %10 = arith.truncf %9 : vector<8x256xf32> to vector<8x256xbf16>
    %c0_8 = arith.constant 0 : index
    %c0_9 = arith.constant 0 : index
    %11 = vector.load %arg2[%c0_8, %c0_9] : memref<384x128xbf16, #tpu.memory_space<vmem>>, vector<256x128xbf16>
    %cst_10 = arith.constant dense<0.000000e+00> : vector<8x128xf32>
    %12 = tpu.matmul %10, %11, %cst_10 {dimension_numbers = #tpu.dot_dimension_numbers<[1], [0], [0], [1], [0, 0, 1, 1], [], []>} : vector<8x256xbf16>, vector<256x128xbf16>, vector<8x128xf32> -> vector<8x128xf32>
    %13 = vector.broadcast %1 : vector<1x128xf32> to vector<8x128xf32>
    %14 = arith.addf %12, %13 : vector<8x128xf32>
    %cst_11 = arith.constant 0.000000e+00 : f32
    %15 = vector.broadcast %cst_11 : f32 to vector<8x128xf32>
    %16 = arith.maximumf %14, %15 : vector<8x128xf32>
    %17 = arith.truncf %16 : vector<8x128xf32> to vector<8x128xbf16>
    %c256_12 = arith.constant 256 : index
    %c0_13 = arith.constant 0 : index
    %18 = vector.load %arg2[%c256_12, %c0_13] : memref<384x128xbf16, #tpu.memory_space<vmem>>, vector<128x128xbf16>
    %cst_14 = arith.constant dense<0.000000e+00> : vector<8x128xf32>
    %19 = tpu.matmul %17, %18, %cst_14 {dimension_numbers = #tpu.dot_dimension_numbers<[1], [0], [0], [1], [0, 0, 1, 1], [], []>} : vector<8x128xbf16>, vector<128x128xbf16>, vector<8x128xf32> -> vector<8x128xf32>
    %20 = vector.broadcast %2 : vector<1x128xf32> to vector<8x128xf32>
    %21 = arith.addf %19, %20 : vector<8x128xf32>
    %c0_15 = arith.constant 0 : index
    %c0_16 = arith.constant 0 : index
    %22 = vector.load %arg4[%c0_15, %c0_16] : memref<8x128xf32, #tpu.memory_space<vmem>>, vector<8x128xf32>
    tpu.vector_store %arg4[%c0_15, %c0_16], %21 {strides = array<i32>} : memref<8x128xf32, #tpu.memory_space<vmem>>, vector<8x128xf32>,
    return
  }
}

</mosaic_0001>

<llo_original>
// kernel: policy_gradient_forward.1
$region0: #{policy_gradient_forward.1}
  #allocation0 [shape = 'u32[]', space=smem, size = 0x4, offset = 0x4, fixed_abs, tag = 'smem constant byte address 0x4 - core index']
  #allocation1 [shape = 'u32[144,128]{1,0:T(1,128)}', space=vmem, size = 0x12000, scoped, tag = 'internal scratch']
  %s0 = inlined_call_operand.vmem [shape: bf16[8,16], index: 0, kind: input, shape index: {}]
  %s1 = inlined_call_operand.vmem [shape: bf16[16,256], index: 1, kind: input, shape index: {}]
  %s2 = inlined_call_operand.hbm [shape: bf16[384,128], index: 2, kind: input, shape index: {}]
  %s3 = inlined_call_operand.hbm [shape: f32[1,512], index: 3, kind: input, shape index: {}]
  %s4 = inlined_call_operand.vmem [shape: f32[8,128], index: 4, kind: output, shape index: {}]
  %s5 = sld [smem:[#allocation0]]
  $region34: #{policy_gradient_forward.1} parent=0
    _
  %s7 = ssub.s32 1, %s5
  %s8 = scalar_select 0, %s7, %s5
  $region1: #{policy_gradient_forward.1} parent=0
    #allocation2 [shape = 'u8[98304]{0}', space=vmem, size = 0x18000, scoped, tag = 'input window, operand 2, single buffered']
    #allocation3 [shape = 's32[1]{0}', space=sflag, size = 0x4, scoped, tag = 'scoped memory for policy_gradient_forward.1']
    #allocation4 [shape = 'u8[2048]{0}', space=vmem, size = 0x800, scoped, tag = 'input window, operand 3, single buffered']
    #allocation5 [shape = 's32[1]{0}', space=sflag, size = 0x4, scoped, tag = 'scoped memory for policy_gradient_forward.1']
    %9 = vsyncpa [#allocation3], 0
    %10 = vsyncpa [#allocation5], 0
    // Predicated region
    $region2: #{policy_gradient_forward.1} parent=1 // pred_check
      _
    $region3: #{policy_gradient_forward.1} parent=1 // pred_check_branch
      %12 = sbr.rel (0) target = $region5
    $region4: #{policy_gradient_forward.1} parent=1 // pred_region
      _
    $region5: #{policy_gradient_forward.1} parent=1 // pred_fallthru
      _
    // Predicated region
    $region6: #{policy_gradient_forward.1} parent=1 // pred_check
      _
    $region7: #{policy_gradient_forward.1} parent=1 // pred_check_branch
      %14 = sbr.rel (0) target = $region9
    $region8: #{policy_gradient_forward.1} parent=1 // pred_region
      _
    $region9: #{policy_gradient_forward.1} parent=1 // pred_fallthru
      _
    // Predicated region
    $region10: #{policy_gradient_forward.1} parent=1 // pred_check
      _
    $region11: #{policy_gradient_forward.1} parent=1 // pred_check_branch
      %16 = sbr.rel (0) target = $region13
    $region12: #{policy_gradient_forward.1} parent=1 // pred_region
      %s18 = ssub.s32 3072, 3072
      %19 = vsyncadd [#allocation3], %s18
      %s20 = sshll.u32 [#allocation2], 4
      %s21 = int_to_ptr.vmem [resolvable:$true] %s20
      %26 = dma.hbm_to_vmem [thread:$0]  %s2, 3072, %s21, [#allocation3], 64, 64, 4
    $region13: #{policy_gradient_forward.1} parent=1 // pred_fallthru
      _
    // Predicated region
    $region14: #{policy_gradient_forward.1} parent=1 // pred_check
      _
    $region15: #{policy_gradient_forward.1} parent=1 // pred_check_branch
      %28 = sbr.rel (0) target = $region17
    $region16: #{policy_gradient_forward.1} parent=1 // pred_region
      %s30 = ssub.s32 64, 64
      %31 = vsyncadd [#allocation5], %s30
      %s33 = sshll.u32 [#allocation4], 4
      %s34 = int_to_ptr.vmem [resolvable:$true] %s33
      %36 = dma.hbm_to_vmem [thread:$0]  %s3, 64, %s34, [#allocation5]
    $region17: #{policy_gradient_forward.1} parent=1 // pred_fallthru
      _
    // Predicated region
    $region18: #{policy_gradient_forward.1} parent=1 // pred_check
      _
    $region19: #{policy_gradient_forward.1} parent=1 // pred_check_branch
      %38 = sbr.rel (0) target = $region21
    $region20: #{policy_gradient_forward.1} parent=1 // pred_region
      %39 = dma.done [#allocation3], 3072
    $region21: #{policy_gradient_forward.1} parent=1 // pred_fallthru
      _
    // Predicated region
    $region22: #{policy_gradient_forward.1} parent=1 // pred_check
      _
    $region23: #{policy_gradient_forward.1} parent=1 // pred_check_branch
      %41 = sbr.rel (0) target = $region25
    $region24: #{policy_gradient_forward.1} parent=1 // pred_region
      %42 = dma.done [#allocation5], 64
    $region25: #{policy_gradient_forward.1} parent=1 // pred_fallthru
      _
    %v44 = vld [vmem:[#allocation4] sm:$0x3]
    %v45 = vld [vmem:[#allocation4 + $0x2] sm:$0x1]
    %v46 = vld [vmem:[#allocation4 + $0x3] sm:$0x1]
    %v47 = vld [vmem:[%s0] sm:$0xf]
    %v48 = vld [vmem:[%s1] sm:$0xff]
    %v49 = vld [vmem:[%s1 + $0x8] sm:$0xff]
    %v51 = vlaneseq
    %v52 = vshrl.u32 %v51, 7
    %v53 = vsub.s32 0, %v52
    %v54 = vrot.slane %v44, %v53
    %v55 = vlaneseq
    %v56 = vshrl.u32 %v55, 7
    %v57 = vsub.s32 1, %v56
    %v58 = vrot.slane %v44, %v57
    %v63 = vunpack.c.l.b16 %v48
    %v64 = vunpack.c.h.b16 %v48
    %v65 = vunpack.c.l.b16 %v49
    %v66 = vunpack.c.h.b16 %v49
    %v67 = vpack.c.b16 %v65, %v63
    %v68 = vpack.c.b16 %v66, %v64
    %vm71 = vcmask 130048
    %v73 = vsel %vm71, %v47, 0
    %75 = vmatprep.subr.bf16.mxu0 %v68
    %76 = vmatpush1.bf16.msra.mxu0 %v67
    %77 = vmatprep.subr.bf16.mxu0 0
    %78 = vmatpush1.bf16.msra.mxu0 0
    %79 = vmatprep.subr.bf16.mxu0 0
    %80 = vmatpush1.bf16.msra.mxu0 0
    %81 = vmatprep.subr.bf16.mxu0 0
    %82 = vmatpush1.bf16.msra.mxu0 0
    %83 = vmatprep.subr.bf16.mxu0 0
    %84 = vmatpush1.bf16.msra.mxu0 0
    %85 = vmatprep.subr.bf16.mxu0 0
    %86 = vmatpush1.bf16.msra.mxu0 0
    %87 = vmatprep.subr.bf16.mxu0 0
    %88 = vmatpush1.bf16.msra.mxu0 0
    %89 = vmatprep.subr.bf16.mxu0 0
    %90 = vmatpush1.bf16.msra.mxu0 0
    %91 = vmatprep.subr.bf16.mxu0 0
    %92 = vmatpush1.bf16.msra.mxu0 0
    %93 = vmatprep.subr.bf16.mxu0 0
    %94 = vmatpush1.bf16.msra.mxu0 0
    %95 = vmatprep.subr.bf16.mxu0 0
    %96 = vmatpush1.bf16.msra.mxu0 0
    %97 = vmatprep.subr.bf16.mxu0 0
    %98 = vmatpush1.bf16.msra.mxu0 0
    %99 = vmatprep.subr.bf16.mxu0 0
    %100 = vmatpush1.bf16.msra.mxu0 0
    %101 = vmatprep.subr.bf16.mxu0 0
    %102 = vmatpush1.bf16.msra.mxu0 0
    %103 = vmatprep.subr.bf16.mxu0 0
    %104 = vmatpush1.bf16.msra.mxu0 0
    %105 = vmatprep.subr.bf16.mxu0 0
    %106 = vmatpush1.bf16.msra.mxu0 0
    %107 = vmatprep.mubr.bf16.mxu0 0
    %108 = vmatmul.mubr.bf16.gmra.mrb[0].mxu0 %v73
    %v109 = vpop.f32.mrb[0].mxu0
    %v110 = vadd.f32 %v54, %v109
    %v111 = vpop.f32.mrb[0].mxu0
    %v112 = vadd.f32 %v58, %v111
    %v113 = vpop.f32.mrb[0].mxu0
    %v114 = vpop.f32.mrb[0].mxu0
    %115 = vdwg.mxu0
    %v116 = vmax.f32 %v110, 0.0
    %v117 = vmax.f32 %v112, 0.0
    %v118 = vpack.c.bf16 %v116, %v116
    %v119 = vpack.c.bf16 %v117, %v117
    %v120 = vld [vmem:[#allocation2] sm:$0xf]
    %v121 = vld [vmem:[#allocation2 + $0x4] sm:$0xf]
    %v122 = vld [vmem:[#allocation2 + $0x8] sm:$0xf]
    %v123 = vld [vmem:[#allocation2 + $0xc] sm:$0xf]
    %v124 = vld [vmem:[#allocation2 + $0x10] sm:$0xf]
    %v125 = vld [vmem:[#allocation2 + $0x14] sm:$0xf]
    %v126 = vld [vmem:[#allocation2 + $0x18] sm:$0xf]
    %v127 = vld [vmem:[#allocation2 + $0x1c] sm:$0xf]
    %v128 = vld [vmem:[#allocation2 + $0x20] sm:$0xf]
    %v129 = vld [vmem:[#allocation2 + $0x24] sm:$0xf]
    %v130 = vld [vmem:[#allocation2 + $0x28] sm:$0xf]
    %v131 = vld [vmem:[#allocation2 + $0x2c] sm:$0xf]
    %v132 = vld [vmem:[#allocation2 + $0x30] sm:$0xf]
    %v133 = vld [vmem:[#allocation2 + $0x34] sm:$0xf]
    %v134 = vld [vmem:[#allocation2 + $0x38] sm:$0xf]
    %v135 = vld [vmem:[#allocation2 + $0x3c] sm:$0xf]
    %v136 = vld [vmem:[#allocation2 + $0x40] sm:$0xf]
    %v137 = vld [vmem:[#allocation2 + $0x44] sm:$0xf]
    %v138 = vld [vmem:[#allocation2 + $0x48] sm:$0xf]
    %v139 = vld [vmem:[#allocation2 + $0x4c] sm:$0xf]
    %v140 = vld [vmem:[#allocation2 + $0x50] sm:$0xf]
    %v141 = vld [vmem:[#allocation2 + $0x54] sm:$0xf]
    %v142 = vld [vmem:[#allocation2 + $0x58] sm:$0xf]
    %v143 = vld [vmem:[#allocation2 + $0x5c] sm:$0xf]
    %v144 = vld [vmem:[#allocation2 + $0x60] sm:$0xf]
    %v145 = vld [vmem:[#allocation2 + $0x64] sm:$0xf]
    %v146 = vld [vmem:[#allocation2 + $0x68] sm:$0xf]
    %v147 = vld [vmem:[#allocation2 + $0x6c] sm:$0xf]
    %v148 = vld [vmem:[#allocation2 + $0x70] sm:$0xf]
    %v149 = vld [vmem:[#allocation2 + $0x74] sm:$0xf]
    %v150 = vld [vmem:[#allocation2 + $0x78] sm:$0xf]
    %v151 = vld [vmem:[#allocation2 + $0x7c] sm:$0xf]
    %v153 = vlaneseq
    %v154 = vshrl.u32 %v153, 7
    %v155 = vsub.s32 0, %v154
    %v156 = vrot.slane %v45, %v155
    %v190 = vunpack.c.l.b16 %v120
    %v191 = vunpack.c.l.b16 %v121
    %v192 = vunpack.c.l.b16 %v122
    %v193 = vunpack.c.l.b16 %v123
    %v194 = vunpack.c.l.b16 %v124
    %v195 = vunpack.c.l.b16 %v125
    %v196 = vunpack.c.l.b16 %v126
    %v197 = vunpack.c.l.b16 %v127
    %v198 = vunpack.c.l.b16 %v128
    %v199 = vunpack.c.l.b16 %v129
    %v200 = vunpack.c.l.b16 %v130
    %v201 = vunpack.c.l.b16 %v131
    %v202 = vunpack.c.l.b16 %v132
    %v203 = vunpack.c.l.b16 %v133
    %v204 = vunpack.c.l.b16 %v134
    %v205 = vunpack.c.l.b16 %v135
    %v206 = vunpack.c.l.b16 %v136
    %v207 = vunpack.c.l.b16 %v137
    %v208 = vunpack.c.l.b16 %v138
    %v209 = vunpack.c.l.b16 %v139
    %v210 = vunpack.c.l.b16 %v140
    %v211 = vunpack.c.l.b16 %v141
    %v212 = vunpack.c.l.b16 %v142
    %v213 = vunpack.c.l.b16 %v143
    %v214 = vunpack.c.l.b16 %v144
    %v215 = vunpack.c.l.b16 %v145
    %v216 = vunpack.c.l.b16 %v146
    %v217 = vunpack.c.l.b16 %v147
    %v218 = vunpack.c.l.b16 %v148
    %v219 = vunpack.c.l.b16 %v149
    %v220 = vunpack.c.l.b16 %v150
    %v221 = vunpack.c.l.b16 %v151
    %v222 = vpack.c.b16 %v191, %v190
    %v223 = vpack.c.b16 %v193, %v192
    %v224 = vpack.c.b16 %v195, %v194
    %v225 = vpack.c.b16 %v197, %v196
    %v226 = vpack.c.b16 %v199, %v198
    %v227 = vpack.c.b16 %v201, %v200
    %v228 = vpack.c.b16 %v203, %v202
    %v229 = vpack.c.b16 %v205, %v204
    %v230 = vpack.c.b16 %v207, %v206
    %v231 = vpack.c.b16 %v209, %v208
    %v232 = vpack.c.b16 %v211, %v210
    %v233 = vpack.c.b16 %v213, %v212
    %v234 = vpack.c.b16 %v215, %v214
    %v235 = vpack.c.b16 %v217, %v216
    %v236 = vpack.c.b16 %v219, %v218
    %v237 = vpack.c.b16 %v221, %v220
    %254 = vmatprep.subr.bf16.mxu0 0
    %255 = vmatpush1.bf16.msra.mxu0 %v222
    %256 = vmatprep.subr.bf16.mxu0 0
    %257 = vmatpush1.bf16.msra.mxu0 %v223
    %258 = vmatprep.subr.bf16.mxu0 0
    %259 = vmatpush1.bf16.msra.mxu0 %v224
    %260 = vmatprep.subr.bf16.mxu0 0
    %261 = vmatpush1.bf16.msra.mxu0 %v225
    %262 = vmatprep.subr.bf16.mxu0 0
    %263 = vmatpush1.bf16.msra.mxu0 %v226
    %264 = vmatprep.subr.bf16.mxu0 0
    %265 = vmatpush1.bf16.msra.mxu0 %v227
    %266 = vmatprep.subr.bf16.mxu0 0
    %267 = vmatpush1.bf16.msra.mxu0 %v228
    %268 = vmatprep.subr.bf16.mxu0 0
    %269 = vmatpush1.bf16.msra.mxu0 %v229
    %270 = vmatprep.subr.bf16.mxu0 0
    %271 = vmatpush1.bf16.msra.mxu0 %v230
    %272 = vmatprep.subr.bf16.mxu0 0
    %273 = vmatpush1.bf16.msra.mxu0 %v231
    %274 = vmatprep.subr.bf16.mxu0 0
    %275 = vmatpush1.bf16.msra.mxu0 %v232
    %276 = vmatprep.subr.bf16.mxu0 0
    %277 = vmatpush1.bf16.msra.mxu0 %v233
    %278 = vmatprep.subr.bf16.mxu0 0
    %279 = vmatpush1.bf16.msra.mxu0 %v234
    %280 = vmatprep.subr.bf16.mxu0 0
    %281 = vmatpush1.bf16.msra.mxu0 %v235
    %282 = vmatprep.subr.bf16.mxu0 0
    %283 = vmatpush1.bf16.msra.mxu0 %v236
    %284 = vmatprep.subr.bf16.mxu0 0
    %285 = vmatpush1.bf16.msra.mxu0 %v237
    %286 = vmatprep.mubr.bf16.mxu0 %v119
    %287 = vmatmul.mubr.bf16.gmra.mrb[0].mxu0 %v118
    %v288 = vpop.f32.mrb[0].mxu0
    %v289 = vadd.f32 %v156, %v288
    %v290 = vpop.f32.mrb[0].mxu0
    %v291 = vpop.f32.mrb[0].mxu0
    %v292 = vpop.f32.mrb[0].mxu0
    %293 = vdwg.mxu0
    %v294 = vmax.f32 %v289, 0.0
    %v295 = vpack.c.bf16 %v294, %v294
    %v296 = vld [vmem:[#allocation2 + $0x80] sm:$0xf]
    %v297 = vld [vmem:[#allocation2 + $0x84] sm:$0xf]
    %v298 = vld [vmem:[#allocation2 + $0x88] sm:$0xf]
    %v299 = vld [vmem:[#allocation2 + $0x8c] sm:$0xf]
    %v300 = vld [vmem:[#allocation2 + $0x90] sm:$0xf]
    %v301 = vld [vmem:[#allocation2 + $0x94] sm:$0xf]
    %v302 = vld [vmem:[#allocation2 + $0x98] sm:$0xf]
    %v303 = vld [vmem:[#allocation2 + $0x9c] sm:$0xf]
    %v304 = vld [vmem:[#allocation2 + $0xa0] sm:$0xf]
    %v305 = vld [vmem:[#allocation2 + $0xa4] sm:$0xf]
    %v306 = vld [vmem:[#allocation2 + $0xa8] sm:$0xf]
    %v307 = vld [vmem:[#allocation2 + $0xac] sm:$0xf]
    %v308 = vld [vmem:[#allocation2 + $0xb0] sm:$0xf]
    %v309 = vld [vmem:[#allocation2 + $0xb4] sm:$0xf]
    %v310 = vld [vmem:[#allocation2 + $0xb8] sm:$0xf]
    %v311 = vld [vmem:[#allocation2 + $0xbc] sm:$0xf]
    %v313 = vlaneseq
    %v314 = vshrl.u32 %v313, 7
    %v315 = vsub.s32 0, %v314
    %v316 = vrot.slane %v46, %v315
    %v334 = vunpack.c.l.b16 %v296
    %v335 = vunpack.c.l.b16 %v297
    %v336 = vunpack.c.l.b16 %v298
    %v337 = vunpack.c.l.b16 %v299
    %v338 = vunpack.c.l.b16 %v300
    %v339 = vunpack.c.l.b16 %v301
    %v340 = vunpack.c.l.b16 %v302
    %v341 = vunpack.c.l.b16 %v303
    %v342 = vunpack.c.l.b16 %v304
    %v343 = vunpack.c.l.b16 %v305
    %v344 = vunpack.c.l.b16 %v306
    %v345 = vunpack.c.l.b16 %v307
    %v346 = vunpack.c.l.b16 %v308
    %v347 = vunpack.c.l.b16 %v309
    %v348 = vunpack.c.l.b16 %v310
    %v349 = vunpack.c.l.b16 %v311
    %v350 = vpack.c.b16 %v335, %v334
    %v351 = vpack.c.b16 %v337, %v336
    %v352 = vpack.c.b16 %v339, %v338
    %v353 = vpack.c.b16 %v341, %v340
    %v354 = vpack.c.b16 %v343, %v342
    %v355 = vpack.c.b16 %v345, %v344
    %v356 = vpack.c.b16 %v347, %v346
    %v357 = vpack.c.b16 %v349, %v348
    %366 = vmatprep.subr.bf16.mxu0 0
    %367 = vmatpush1.bf16.msra.mxu0 %v350
    %368 = vmatprep.subr.bf16.mxu0 0
    %369 = vmatpush1.bf16.msra.mxu0 %v351
    %370 = vmatprep.subr.bf16.mxu0 0
    %371 = vmatpush1.bf16.msra.mxu0 %v352
    %372 = vmatprep.subr.bf16.mxu0 0
    %373 = vmatpush1.bf16.msra.mxu0 %v353
    %374 = vmatprep.subr.bf16.mxu0 0
    %375 = vmatpush1.bf16.msra.mxu0 %v354
    %376 = vmatprep.subr.bf16.mxu0 0
    %377 = vmatpush1.bf16.msra.mxu0 %v355
    %378 = vmatprep.subr.bf16.mxu0 0
    %379 = vmatpush1.bf16.msra.mxu0 %v356
    %380 = vmatprep.subr.bf16.mxu0 0
    %381 = vmatpush1.bf16.msra.mxu0 %v357
    %382 = vmatprep.subr.bf16.mxu0 0
    %383 = vmatpush1.bf16.msra.mxu0 0
    %384 = vmatprep.subr.bf16.mxu0 0
    %385 = vmatpush1.bf16.msra.mxu0 0
    %386 = vmatprep.subr.bf16.mxu0 0
    %387 = vmatpush1.bf16.msra.mxu0 0
    %388 = vmatprep.subr.bf16.mxu0 0
    %389 = vmatpush1.bf16.msra.mxu0 0
    %390 = vmatprep.subr.bf16.mxu0 0
    %391 = vmatpush1.bf16.msra.mxu0 0
    %392 = vmatprep.subr.bf16.mxu0 0
    %393 = vmatpush1.bf16.msra.mxu0 0
    %394 = vmatprep.subr.bf16.mxu0 0
    %395 = vmatpush1.bf16.msra.mxu0 0
    %396 = vmatprep.subr.bf16.mxu0 0
    %397 = vmatpush1.bf16.msra.mxu0 0
    %398 = vmatprep.mubr.bf16.mxu0 0
    %399 = vmatmul.mubr.bf16.gmra.mrb[0].mxu0 %v295
    %v400 = vpop.f32.mrb[0].mxu0
    %v401 = vadd.f32 %v316, %v400
    %v402 = vpop.f32.mrb[0].mxu0
    %v403 = vpop.f32.mrb[0].mxu0
    %v404 = vpop.f32.mrb[0].mxu0
    %405 = vdwg.mxu0
    %406 = vst [vmem:[%s4] sm:$0xff] %v401
    // Predicated region
    $region26: #{policy_gradient_forward.1} parent=1 // pred_check
      _
    $region27: #{policy_gradient_forward.1} parent=1 // pred_check_branch
      %408 = sbr.rel (0) target = $region29
    $region28: #{policy_gradient_forward.1} parent=1 // pred_region
      _
    $region29: #{policy_gradient_forward.1} parent=1 // pred_fallthru
      _
    // Predicated region
    $region30: #{policy_gradient_forward.1} parent=1 // pred_check
      _
    $region31: #{policy_gradient_forward.1} parent=1 // pred_check_branch
      %410 = sbr.rel (0) target = $region33
    $region32: #{policy_gradient_forward.1} parent=1 // pred_region
      _
    $region33: #{policy_gradient_forward.1} parent=1 // pred_fallthru
      _
    %411 = vsyncpa [#allocation3], 1
    %412 = vsyncpa [#allocation5], 1

</llo_original>
